<compile_context>
chip_gen: v5e
topology: v5e:2x2
jax: 0.10.0
libtpu: 0.0.40
codegen_flags: <defaults>
</compile_context>

<pallas_src>
import jax
import jax.numpy as jnp
from jax.experimental import pallas as pl
from jax.experimental.pallas import tpu as pltpu

_LANE = 128
_TILE_CAP = 512                  # 128-multiple; a (512, 512) f32 slab is ~1 MiB
_FOLD_TARGET_BYTES = 2 << 20     # ~2 MiB folded blocks (v7x feedback); fine on v5e/v6e
_MAX_BATCH_FOLD = 64


def _caps_transpose_kernel(x_ref, o_ref):
    # x_ref block: (bb, t_c, t_hw)  ->  o_ref block: (bb, t_hw, t_c)
    # Single batched minor-dim transpose; Mosaic strip-mines it on the XLU.
    o_ref[...] = jnp.transpose(x_ref[...], (0, 2, 1))


def _pick_tile(extent, cap=_TILE_CAP):
    """Full extent if it fits under `cap`, else a fixed 128-multiple tile.

    The (8, 128) rule constrains the BLOCK shape, not the array: a 128-multiple
    block plus a pl.cdiv grid lets Pallas clip the ragged tail, so we never
    fall back to a giant full-extent block for awkward extents.
    """
    if extent <= cap:
        return extent
    return cap


def _pick_batch_fold(b, slab_bytes):
    """Fold several batch rows into one block to amortize per-step overhead."""
    fold = min(b, _MAX_BATCH_FOLD, max(1, _FOLD_TARGET_BYTES // max(slab_bytes, 1)))
    return max(1, int(fold))


def _caps_transpose_pallas(x2):
    """(B, C, HW) -> (B, HW, C) batched transpose.  Lane-dense path (C >= 128)."""
    b, c, hw = x2.shape
    itemsize = jnp.dtype(x2.dtype).itemsize

    t_c = _pick_tile(c)       # output minor dim: full C or a 128-multiple tile
    t_hw = _pick_tile(hw)
    bb = _pick_batch_fold(b, t_c * t_hw * itemsize)

    def grid_of(bb_, t_hw_):
        return (pl.cdiv(b, bb_), pl.cdiv(c, t_c), pl.cdiv(hw, t_hw_))

    grid = grid_of(bb, t_hw)
    # Keep >= 2 grid steps along a "parallel" axis so both v7x TensorCores get
    # work even for shapes that would otherwise collapse to grid (1, 1, 1).
    if grid[0] * grid[1] * grid[2] < 2:
        if b >= 2:
            bb = pl.cdiv(b, 2)
        elif hw > _LANE:
            t_hw = _LANE * pl.cdiv(pl.cdiv(hw, 2), _LANE)
        grid = grid_of(bb, t_hw)

    return pl.pallas_call(
        _caps_transpose_kernel,
        out_shape=jax.ShapeDtypeStruct((b, hw, c), x2.dtype),
        grid_spec=pltpu.PrefetchScalarGridSpec(
            num_scalar_prefetch=0,
            grid=grid,
            in_specs=[
                pl.BlockSpec((bb, t_c, t_hw), lambda bi, ci, hi: (bi, ci, hi)),
            ],
            out_specs=pl.BlockSpec((bb, t_hw, t_c), lambda bi, ci, hi: (bi, hi, ci)),
        ),
        compiler_params=pltpu.CompilerParams(
            # Pure data movement: every grid axis is independent.
            dimension_semantics=("parallel", "parallel", "parallel"),
            vmem_limit_bytes=32 * 1024 * 1024,
        ),
        cost_estimate=pl.CostEstimate(
            flops=0,
            transcendentals=0,
            bytes_accessed=2 * b * c * hw * itemsize,
        ),
    )(x2)


def convert_to_caps(x, dim=16):
    """Pallas implementation of ConvertToCaps.forward for an NCHW input."""
    b, c, h, w = x.shape
    hw = h * w
    assert (hw * c) % dim == 0, "H*W*C must be divisible by dim"

    # Contiguous (free) reshape: (B, C, H, W) -> (B, C, HW).
    x2 = x.reshape(b, c, hw)

    if c >= _LANE:
        # Lane-dense tiled Pallas transpose.
        y = _caps_transpose_pallas(x2)
    else:
        # C < 128 would force masked, lane-sparse vst.msk stores (and strided
        # HBM writes when t_c < C); XLA's transpose is the faster path here.
        # TODO(synk): lane-dense flat-slab Pallas output ((B, HW*C) with an
        # in-kernel (t_hw, C) -> (t_hw*C,) collapse) once that Mosaic shape
        # cast is confirmed to lower cleanly.
        y = jnp.transpose(x2, (0, 2, 1))

    # Contiguous row-major reshape (bitcast): (B, HW, C) -> (B, HW*C//dim, dim).
    return y.reshape(b, -1, dim)


def _reference(x, dim=16):
    # Pure-JAX mirror of the PyTorch forward (for a correctness check).
    b, c, h, w = x.shape
    xi = x[:, :, None, :, :]                 # (B, C, 1, H, W)
    xp = jnp.transpose(xi, (0, 3, 4, 1, 2))  # (B, H, W, C, 1)
    return xp.reshape(b, -1, dim)


if __name__ == "__main__":
    key = jax.random.PRNGKey(0)
    dim = 16
    k1, k2, k3 = jax.random.split(key, 3)

    # 1) Lane-dense Pallas path (C >= 128): B=2, C=128, H=W=8.
    x1 = jax.random.normal(k1, (2, 128, 8, 8), dtype=jnp.float32)
    out1 = jax.block_until_ready(convert_to_caps(x1, dim=dim))
    assert out1.shape == (2, 8 * 8 * 128 // dim, dim), out1.shape
    assert out1.dtype == x1.dtype
    assert jnp.allclose(out1, _reference(x1, dim=dim)), "Pallas (aligned) != reference"

    # 2) Pallas path with a ragged HW tail (HW=576 -> 512-tile + clipped tail).
    x2 = jax.random.normal(k2, (2, 128, 24, 24), dtype=jnp.float32)
    out2 = jax.block_until_ready(convert_to_caps(x2, dim=dim))
    assert jnp.allclose(out2, _reference(x2, dim=dim)), "Pallas (ragged) != reference"

    # 3) Small-C fallback path (C=4 < 128 dispatches to XLA's transpose).
    x3 = jax.random.normal(k3, (2, 4, 16, 16), dtype=jnp.float32)
    out3 = jax.block_until_ready(convert_to_caps(x3, dim=dim))
    assert jnp.allclose(out3, _reference(x3, dim=dim)), "small-C fallback != reference"

    print("KERNEL_OK")
</pallas_src>

<mosaic_0001>
module attributes {stable_mosaic.version = 11 : i64} {
  func.func @_caps_transpose_kernel(%arg0: i32, %arg1: i32, %arg2: i32, %arg3: memref<1x128x64xf32, #tpu.memory_space<vmem>>, %arg4: memref<1x64x128xf32, #tpu.memory_space<vmem>>) attributes {dimension_semantics = [#tpu.dimension_semantics<parallel>, #tpu.dimension_semantics<parallel>, #tpu.dimension_semantics<parallel>], iteration_bounds = array<i64: 2, 1, 1>, scalar_prefetch = 0 : i64, scratch_operands = 0 : i64, tpu.core_type = #tpu.core_type<tc>, window_params = [{transform_indices = @transform_0, window_bounds = array<i64: 1, 128, 64>}, {transform_indices = @transform_1, window_bounds = array<i64: 1, 64, 128>}]} {
    %c0 = arith.constant 0 : index
    %c0_0 = arith.constant 0 : index
    %c0_1 = arith.constant 0 : index
    %0 = vector.load %arg3[%c0, %c0_0, %c0_1] : memref<1x128x64xf32, #tpu.memory_space<vmem>>, vector<1x128x64xf32>
    %1 = tpu.transpose %0, [0, 2, 1] : vector<1x128x64xf32> -> vector<1x64x128xf32>
    %c0_2 = arith.constant 0 : index
    %c0_3 = arith.constant 0 : index
    %c0_4 = arith.constant 0 : index
    %2 = vector.load %arg4[%c0_2, %c0_3, %c0_4] : memref<1x64x128xf32, #tpu.memory_space<vmem>>, vector<1x64x128xf32>
    tpu.vector_store %arg4[%c0_2, %c0_3, %c0_4], %1 {strides = array<i32>} : memref<1x64x128xf32, #tpu.memory_space<vmem>>, vector<1x64x128xf32>,
    return
  }
  func.func @transform_0(%arg0: i32, %arg1: i32, %arg2: i32) -> (i32, i32, i32) {
    %c0_i32 = arith.constant 0 : i32
    return %arg0, %arg1, %arg2 : i32, i32, i32
  }
  func.func @transform_1(%arg0: i32, %arg1: i32, %arg2: i32) -> (i32, i32, i32) {
    %c0_i32 = arith.constant 0 : i32
    return %arg0, %arg2, %arg1 : i32, i32, i32
  }
}

</mosaic_0001>

<llo_original>
// kernel: tpu_custom_call.1
$region0: #{tpu_custom_call.1}
  #allocation0 [shape = 'u32[]', space=smem, size = 0x4, offset = 0x4, fixed_abs, tag = 'smem constant byte address 0x4 - core index']
  #allocation1 [shape = 'u32[72,128]{1,0:T(1,128)}', space=vmem, size = 0x9000, scoped, tag = 'internal scratch']
  %s0 = inlined_call_operand.vmem [shape: f32[2,128,64], index: 0, kind: input, shape index: {}]
  %s1 = inlined_call_operand.hbm [shape: f32[2,64,128], index: 1, kind: output, shape index: {}]
  %s2 = sld [smem:[#allocation0]]
  $region37: #{tpu_custom_call.1} parent=0
    _
  %s4 = ssub.s32 1, %s2
  %s5 = scalar_select 0, %s4, %s2
  $region1: #{tpu_custom_call.1} parent=0
    #allocation2 [shape = 'u8[65536]{0}', space=vmem, size = 0x10000, scoped, tag = 'output window, operand 0']
    #allocation3 [shape = 's32[2]{0}', space=sflag, size = 0x8, scoped, tag = 'scoped memory for tpu_custom_call.1']
    %6 = vsyncpa [#allocation3], 0
    %s7 = scalar_lea.sflag [#allocation3], 1
    %8 = vsyncpa %s7, 0
    loop: start=0, step=1, limit=4
    $region2: #{tpu_custom_call.1} parent=1 // loop_pre_header
      _
    $region3: #{tpu_custom_call.1} parent=1 // loop_header
      %s10 = sphi 0, %s14
      %p11 = scmp.ge.s32.totalorder %s10, 4
      %s17 = sphi 0, %s36
      %s18 = sphi 0, %s32
      %s19 = sphi 0, %s28
      %s20 = sphi 0, %s17
      %s21 = sphi 0, %s18
      %s22 = sphi 0, %s19
      %s23 = sphi 0, %s20
      %s24 = sphi 0, %s21
      %s25 = sphi 0, %s22
      %s43 = sphi 0, %s45
      %s46 = sphi 0, %s43
      %s47 = sphi 0, %s46
      %s63 = sphi 0, %s47
      %s73 = sphi 0, %s75
      %s76 = sphi 0, %s73
      %s77 = sphi 0, %s76
      %s93 = sphi 0, %s77
    $region4: #{tpu_custom_call.1} parent=1 // loop_header_branch
      %13 = sbr.rel (%p11) target = $region8
    $region5: #{tpu_custom_call.1} parent=1 // loop_body
      %s15 = ssub.s32 %s10, 1
      %s16 = ssub.s32 %s10, 2
      %s26 = sadd.s32 1, %s19
      %p27 = scmp.ge.s32.totalorder %s26, 1
      %s28 = scalar_select %p27, 0, %s26
      %s29 = sadd.s32 1, %s18
      %s30 = scalar_select %p27, %s29, %s18
      %p31 = scmp.ge.s32.totalorder %s30, 1
      %s32 = scalar_select %p31, 0, %s30
      %s33 = sadd.s32 1, %s17
      %s34 = scalar_select %p31, %s33, %s17
      %p35 = scmp.ge.s32.totalorder %s34, 2
      %s36 = scalar_select %p35, 0, %s34
      %s37 = ssub.s32 %s17, %s36
      %s38 = ssub.s32 %s18, %s32
      %s39 = sor.u32 %s37, %s38
      %s40 = ssub.s32 %s19, %s28
      %s41 = sor.u32 %s39, %s40
      %p42 = scmp.eq.s32.totalorder %s41, 0
      %s44 = sadd.s32 %s43, 1
      %s45 = scalar_select %p42, %s43, %s44
      %p48 = pneg %p42
      %p49 = scmp.eq.s32.totalorder %s10, 1
      %p50 = por %p48, %p49
      %p51 = scmp.ne.s32.totalorder %s43, %s46
      %p52 = scmp.eq.s32.totalorder %s10, 0
      %p53 = por %p51, %p52
      %p54 = scmp.ne.s32.totalorder %s43, %s46
      %p55 = scmp.eq.s32.totalorder %s15, 1
      %p56 = por %p54, %p55
      %p57 = scmp.ne.s32.totalorder %s46, %s47
      %p58 = scmp.eq.s32.totalorder %s15, 0
      %p59 = por %p57, %p58
      %p60 = scmp.ne.s32.totalorder %s46, %s47
      %p61 = scmp.eq.s32.totalorder %s16, 1
      %p62 = por %p60, %p61
      %p64 = scmp.ne.s32.totalorder %s47, %s63
      %p65 = scmp.eq.s32.totalorder %s16, 0
      %p66 = por %p64, %p65
      %s67 = ssub.s32 %s17, %s36
      %s68 = ssub.s32 %s19, %s28
      %s69 = sor.u32 %s67, %s68
      %s70 = ssub.s32 %s18, %s32
      %s71 = sor.u32 %s69, %s70
      %p72 = scmp.eq.s32.totalorder %s71, 0
      %s74 = sadd.s32 %s73, 1
      %s75 = scalar_select %p72, %s73, %s74
      %p78 = pneg %p72
      %p79 = scmp.eq.s32.totalorder %s10, 1
      %p80 = por %p78, %p79
      %p81 = scmp.ne.s32.totalorder %s73, %s76
      %p82 = scmp.eq.s32.totalorder %s10, 0
      %p83 = por %p81, %p82
      %p84 = scmp.ne.s32.totalorder %s73, %s76
      %p85 = scmp.eq.s32.totalorder %s15, 1
      %p86 = por %p84, %p85
      %p87 = scmp.ne.s32.totalorder %s76, %s77
      %p88 = scmp.eq.s32.totalorder %s15, 0
      %p89 = por %p87, %p88
      %p90 = scmp.ne.s32.totalorder %s76, %s77
      %p91 = scmp.eq.s32.totalorder %s16, 1
      %p92 = por %p90, %p91
      %p94 = scmp.ne.s32.totalorder %s77, %s93
      %p95 = scmp.eq.s32.totalorder %s16, 0
      %p96 = por %p94, %p95
      %p97 = scmp.le.s32.totalorder 1, %s10
      %p98 = scmp.lt.s32.totalorder %s10, 3
      %p99 = pnand %p97, %p98
      %p100 = pneg %p99
      // Predicated region
      $region9: #{tpu_custom_call.1} parent=5 // pred_check
        _
      $region10: #{tpu_custom_call.1} parent=5 // pred_check_branch
        %102 = sbr.rel (%p99) target = $region12
      $region11: #{tpu_custom_call.1} parent=5 // pred_region
        %s103 = ssub.s32 %s10, 1
      $region12: #{tpu_custom_call.1} parent=5 // pred_fallthru
        _
      %p104 = scmp.lt.s32.totalorder %s10, 2
      // Predicated region
      $region13: #{tpu_custom_call.1} parent=5 // pred_check
        %p105 = pneg %p104
      $region14: #{tpu_custom_call.1} parent=5 // pred_check_branch
        %107 = sbr.rel (%p105) target = $region16
      $region15: #{tpu_custom_call.1} parent=5 // pred_region
        // Predicated region
        $region17: #{tpu_custom_call.1} parent=15 // pred_check
          %p108 = pneg %p53
        $region18: #{tpu_custom_call.1} parent=15 // pred_check_branch
          %110 = sbr.rel (%p108) target = $region20
        $region19: #{tpu_custom_call.1} parent=15 // pred_region
          %s111 = smul.u32 16, %s18
          %p112 = scmp.lt.s32.totalorder %s17, 1
          %s113 = scalar_select %p112, %s17, 1
          %p114 = scmp.lt.s32.totalorder %s111, 15
          %s115 = scalar_select %p114, %s111, 15
          %p116 = scmp.lt.s32.totalorder %s19, 0
          %s117 = scalar_select %p116, %s19, 0
          %s118 = sadd.s32 %s117, %s115
          %s119 = smul.addr %s113, 16
          %s120 = sadd.s32 %s118, %s119
          %s121 = smul.addr %s120, 8
          %s122 = scalar_lea.vmem %s0, %s121
          %s123 = smul.u32 16, %s18
        $region20: #{tpu_custom_call.1} parent=15 // pred_fallthru
          _
      $region16: #{tpu_custom_call.1} parent=5 // pred_fallthru
        _
      %p124 = scmp.le.s32.totalorder 1, %s10
      %p125 = scmp.lt.s32.totalorder %s10, 3
      %p126 = pnand %p124, %p125
      %p127 = pneg %p126
      // Predicated region
      $region21: #{tpu_custom_call.1} parent=5 // pred_check
        _
      $region22: #{tpu_custom_call.1} parent=5 // pred_check_branch
        %129 = sbr.rel (%p126) target = $region24
      $region23: #{tpu_custom_call.1} parent=5 // pred_region
        %s130 = ssub.s32 %s10, 1
        %s131 = smul.u32 16, %s21
        %p132 = scmp.lt.s32.totalorder %s20, 1
        %s133 = scalar_select %p132, %s20, 1
        %p134 = scmp.lt.s32.totalorder %s131, 15
        %s135 = scalar_select %p134, %s131, 15
        %p136 = scmp.lt.s32.totalorder %s22, 0
        %s137 = scalar_select %p136, %s22, 0
        %s138 = sadd.s32 %s137, %s135
        %s139 = smul.addr %s133, 16
        %s140 = sadd.s32 %s138, %s139
        %s141 = smul.addr %s140, 8
        %s142 = scalar_lea.vmem %s0, %s141
        %p143 = pneg %p59
        %p144 = pneg %p56
        %p145 = pneg %p89
        %p146 = pneg %p86
        %s147 = sand.u32 %s76, 1
        %s148 = scalar_lea.sflag [#allocation3], %s147
        %s149 = sand.u32 %s76, 1
        %s150 = smul.addr %s149, 64
        %s151 = scalar_lea.vmem [#allocation2], %s150
        %s152 = smul.u32 16, %s21
        %p153 = scmp.lt.s32.totalorder %s20, 1
        %s154 = scalar_select %p153, %s20, 1
        %p155 = scmp.lt.s32.totalorder %s152, 15
        %s156 = scalar_select %p155, %s152, 15
        %p157 = scmp.lt.s32.totalorder %s22, 0
        %s158 = scalar_select %p157, %s22, 0
        %s159 = sadd.s32 %s158, %s156
        %s160 = smul.addr %s154, 16
        %s161 = sadd.s32 %s159, %s160
        %s162 = smul.addr %s161, 8
        %s163 = scalar_lea.vmem %s0, %s162
        %s164 = smul.u32 16, %s21
        %s165 = smul.u32 8, %s22
        %v166 = vld [vmem:[%s163] sm:$0xff]
        %v167 = vld [vmem:[%s163 + $0x8] sm:$0xff]
        %v168 = vld [vmem:[%s163 + $0x10] sm:$0xff]
        %v169 = vld [vmem:[%s163 + $0x18] sm:$0xff]
        %v170 = vld [vmem:[%s163 + $0x20] sm:$0xff]
        %v171 = vld [vmem:[%s163 + $0x28] sm:$0xff]
        %v172 = vld [vmem:[%s163 + $0x30] sm:$0xff]
        %v173 = vld [vmem:[%s163 + $0x38] sm:$0xff]
        %v174 = vld [vmem:[%s163 + $0x40] sm:$0xff]
        %v175 = vld [vmem:[%s163 + $0x48] sm:$0xff]
        %v176 = vld [vmem:[%s163 + $0x50] sm:$0xff]
        %v177 = vld [vmem:[%s163 + $0x58] sm:$0xff]
        %v178 = vld [vmem:[%s163 + $0x60] sm:$0xff]
        %v179 = vld [vmem:[%s163 + $0x68] sm:$0xff]
        %v180 = vld [vmem:[%s163 + $0x70] sm:$0xff]
        %v181 = vld [vmem:[%s163 + $0x78] sm:$0xff]
        %182 = vxpose.xlu0.b32.start [1/16] %v166, 128
        %183 = vxpose.xlu0.b32.cont [2/16] %v167, 128
        %184 = vxpose.xlu0.b32.cont [3/16] %v168, 128
        %185 = vxpose.xlu0.b32.cont [4/16] %v169, 128
        %186 = vxpose.xlu0.b32.cont [5/16] %v170, 128
        %187 = vxpose.xlu0.b32.cont [6/16] %v171, 128
        %188 = vxpose.xlu0.b32.cont [7/16] %v172, 128
        %189 = vxpose.xlu0.b32.cont [8/16] %v173, 128
        %190 = vxpose.xlu0.b32.cont [9/16] %v174, 128
        %191 = vxpose.xlu0.b32.cont [10/16] %v175, 128
        %192 = vxpose.xlu0.b32.cont [11/16] %v176, 128
        %193 = vxpose.xlu0.b32.cont [12/16] %v177, 128
        %194 = vxpose.xlu0.b32.cont [13/16] %v178, 128
        %195 = vxpose.xlu0.b32.cont [14/16] %v179, 128
        %196 = vxpose.xlu0.b32.cont [15/16] %v180, 128
        %197 = vxpose.xlu0.b32.end [16/16] %v181, 128
        %v198 = vpop.trf.xlu0
        %v199 = vpop.trf.xlu0
        %v200 = vpop.trf.xlu0
        %v201 = vpop.trf.xlu0
        %v202 = vpop.trf.xlu0
        %v203 = vpop.trf.xlu0
        %v204 = vpop.trf.xlu0
        %v205 = vpop.trf.xlu0
        %v206 = vpop.trf.xlu0
        %v207 = vpop.trf.xlu0
        %v208 = vpop.trf.xlu0
        %v209 = vpop.trf.xlu0
        %v210 = vpop.trf.xlu0
        %v211 = vpop.trf.xlu0
        %v212 = vpop.trf.xlu0
        %v213 = vpop.trf.xlu0
        %214 = vst [vmem:[%s151] sm:$0xff] %v198
        %215 = vst [vmem:[%s151 + $0x8] sm:$0xff] %v199
        %216 = vst [vmem:[%s151 + $0x10] sm:$0xff] %v200
        %217 = vst [vmem:[%s151 + $0x18] sm:$0xff] %v201
        %218 = vst [vmem:[%s151 + $0x20] sm:$0xff] %v202
        %219 = vst [vmem:[%s151 + $0x28] sm:$0xff] %v203
        %220 = vst [vmem:[%s151 + $0x30] sm:$0xff] %v204
        %221 = vst [vmem:[%s151 + $0x38] sm:$0xff] %v205
        %s222 = sand.u32 %s76, 1
        %s223 = scalar_lea.sflag [#allocation3], %s222
        %s224 = sand.u32 %s76, 1
        %s225 = smul.addr %s224, 64
        %s226 = scalar_lea.vmem [#allocation2], %s225
        // Predicated region
        $region25: #{tpu_custom_call.1} parent=23 // pred_check
          %p227 = pneg %p86
        $region26: #{tpu_custom_call.1} parent=23 // pred_check_branch
          %229 = sbr.rel (%p227) target = $region28
        $region27: #{tpu_custom_call.1} parent=23 // pred_region
          %s230 = smul.u32 8, %s22
          %232 = vsyncadd %s223, 0
          %s233 = sadd.s32 %s21, %s230
          %s234 = smul.addr %s20, 8
          %s235 = sadd.s32 %s233, %s234
          %s236 = smul.addr %s235, 8
          %s237 = scalar_lea.hbm %s1, %s236
          %s238 = sshll.u32 %s226, 4
          %s239 = int_to_ptr.vmem [resolvable:$true] %s238
          %s240 = sshll.u32 %s237, 4
          %s241 = int_to_ptr.hbm [resolvable:$true] %s240
          %246 = dma.vmem_to_hbm [thread:$0]  %s239, 1024, %s241, %s223, 128, 128, 8
        $region28: #{tpu_custom_call.1} parent=23 // pred_fallthru
          _
      $region24: #{tpu_custom_call.1} parent=5 // pred_fallthru
        _
      %p247 = scmp.le.s32.totalorder 2, %s10
      // Predicated region
      $region29: #{tpu_custom_call.1} parent=5 // pred_check
        %p248 = pneg %p247
      $region30: #{tpu_custom_call.1} parent=5 // pred_check_branch
        %250 = sbr.rel (%p248) target = $region32
      $region31: #{tpu_custom_call.1} parent=5 // pred_region
        %s251 = ssub.s32 %s10, 2
        // Predicated region
        $region33: #{tpu_custom_call.1} parent=31 // pred_check
          %p252 = pneg %p92
        $region34: #{tpu_custom_call.1} parent=31 // pred_check_branch
          %254 = sbr.rel (%p252) target = $region36
        $region35: #{tpu_custom_call.1} parent=31 // pred_region
          %s255 = sand.u32 %s77, 1
          %s256 = scalar_lea.sflag [#allocation3], %s255
          %s257 = sand.u32 %s77, 1
          %s258 = smul.addr %s257, 64
          %s259 = scalar_lea.vmem [#allocation2], %s258
          %261 = dma.done %s256, 1024
        $region36: #{tpu_custom_call.1} parent=31 // pred_fallthru
          _
      $region32: #{tpu_custom_call.1} parent=5 // pred_fallthru
        _
    $region6: #{tpu_custom_call.1} parent=1 // loop_footer
      %s14 = sadd.s32 1, %s10
    $region7: #{tpu_custom_call.1} parent=1 // loop_footer_branch
      %9 = sbr.rel target = $region3
    $region8: #{tpu_custom_call.1} parent=1 // loop_exit
      _
    %262 = vsyncpa [#allocation3], 1
    %s263 = scalar_lea.sflag [#allocation3], 1
    %264 = vsyncpa %s263, 1

</llo_original>
